<compile_context>
chip_gen: v7x
topology: tpu7x:2x2x1
jax: 0.10.0
libtpu: 0.0.40
codegen_flags: <defaults>
</compile_context>

<pallas_src>
import functools

import jax
import jax.numpy as jnp
from jax.experimental import pallas as pl
from jax.experimental.pallas import tpu as pltpu


def _layernorm_kernel(x_ref, a_ref, b_ref, o_ref, *, eps, n_valid, f_pad):
    x = x_ref[...].astype(jnp.float32)          # (tm, Fp)
    a = a_ref[...]                              # (1, Fp), already float32
    b = b_ref[...]                              # (1, Fp), already float32

    # Padded feature columns (if any) are zero, so the plain sum already
    # equals the sum over the true F columns.
    mean = jnp.sum(x, axis=-1, keepdims=True) / n_valid     # (tm, 1)
    d = x - mean
    d2 = d * d
    if f_pad > n_valid:
        # Padded columns have d = -mean, so mask them out of the variance.
        lane = jax.lax.broadcasted_iota(jnp.int32, x.shape, 1)
        d2 = jnp.where(lane < n_valid, d2, 0.0)
    var = jnp.sum(d2, axis=-1, keepdims=True) / (n_valid - 1)   # unbiased N-1
    std = jnp.sqrt(var)
    # Per-row reciprocal (shape (tm,1)) instead of a (tm,F)-wide divide.
    inv = pl.reciprocal(std + eps, approx=False)
    y = a * (d * inv) + b                                    # padded cols -> 0
    o_ref[...] = y.astype(o_ref.dtype)


def _choose_row_tile(rows: int, f_pad: int) -> int:
    """Row tile big enough to amortize grid-step overhead, small enough that
    2x double-buffered (in + out) blocks plus f32 temporaries stay inside the
    48 MiB VMEM budget (sized for v7x's 64 MiB physical VMEM)."""
    target_block_bytes = 4 << 20                 # ~4 MiB f32 input block
    tile = (target_block_bytes // (f_pad * 4)) // 8 * 8
    tile = max(8, min(tile, 8192))
    if rows >= 32:
        # Keep at least ~4 grid steps so both v7x TensorCores get work.
        tile = min(tile, max(8, (rows // 4) // 8 * 8))
    else:
        tile = 8
    return tile


def layer_norm(x, a_2, b_2, eps=1e-6, *, row_tile=None):
    """LayerNorm over the last axis of x.  x: (..., F); a_2, b_2: (F,)."""
    orig_shape = x.shape
    F = orig_shape[-1]
    x2 = x.reshape(-1, F)
    rows = x2.shape[0]

    # Lane-dense feature axis: pad F up to a multiple of 128 only when needed.
    f_pad = -(-F // 128) * 128
    need_fpad = f_pad != F

    # Hoist the gamma/beta float32 cast out of the kernel.
    a2 = a_2.astype(jnp.float32).reshape(1, F)
    b2 = b_2.astype(jnp.float32).reshape(1, F)
    if need_fpad:
        pad = f_pad - F
        x2 = jnp.pad(x2, ((0, 0), (0, pad)))     # zeros: sums unaffected
        a2 = jnp.pad(a2, ((0, 0), (0, pad)))     # zeros: padded outputs = 0
        b2 = jnp.pad(b2, ((0, 0), (0, pad)))

    if row_tile is None:
        row_tile = _choose_row_tile(rows, f_pad)
    row_tile = max(8, (row_tile // 8) * 8)

    kernel = functools.partial(
        _layernorm_kernel, eps=float(eps), n_valid=int(F), f_pad=int(f_pad))

    # Ragged last row-block: no host-side row padding / slicing; Pallas masks
    # the partial block (its rows are never consumed).
    grid = (pl.cdiv(rows, row_tile),)

    out = pl.pallas_call(
        kernel,
        out_shape=jax.ShapeDtypeStruct((rows, f_pad), x.dtype),
        grid_spec=pltpu.PrefetchScalarGridSpec(
            num_scalar_prefetch=0,
            grid=grid,
            in_specs=[
                pl.BlockSpec((row_tile, f_pad), lambda i: (i, 0)),
                pl.BlockSpec((1, f_pad), lambda i: (0, 0)),
                pl.BlockSpec((1, f_pad), lambda i: (0, 0)),
            ],
            out_specs=pl.BlockSpec((row_tile, f_pad), lambda i: (i, 0)),
        ),
        compiler_params=pltpu.CompilerParams(
            dimension_semantics=("parallel",),
            # Raise the scoped-VMEM limit so larger tiles can double-buffer;
            # 48 MiB fits v7x's 64 MiB physical VMEM (v5e/v6e have 128 MiB).
            vmem_limit_bytes=48 << 20,
        ),
    )(x2, a2, b2)

    if need_fpad:
        out = out[:, :F]
    return out.reshape(orig_shape)


if __name__ == "__main__":
    key = jax.random.PRNGKey(0)
    batch, seq, hidden = 2, 8, 32

    x = jax.random.normal(key, (batch, seq, hidden), dtype=jnp.float32)
    # nn.Parameter(torch.ones(features)) / nn.Parameter(torch.zeros(features))
    a_2 = jnp.ones((hidden,), dtype=jnp.float32)
    b_2 = jnp.zeros((hidden,), dtype=jnp.float32)

    y = layer_norm(x, a_2, b_2, eps=1e-6)
    y = jax.block_until_ready(y)

    # Pure-JAX reference with the same (unbiased std, eps-on-std) semantics.
    mean = jnp.mean(x, axis=-1, keepdims=True)
    std = jnp.std(x, axis=-1, keepdims=True, ddof=1)
    ref = a_2 * (x - mean) / (std + 1e-6) + b_2
    assert jnp.allclose(y, ref, atol=1e-5, rtol=1e-5), "mismatch vs reference"

    print("KERNEL_OK")
</pallas_src>

<mosaic_0001>
module attributes {stable_mosaic.version = 11 : i64} {
  func.func @_layernorm_kernel(%arg0: i32, %arg1: memref<8x128xf32, #tpu.memory_space<vmem>>, %arg2: memref<1x128xf32, #tpu.memory_space<vmem>>, %arg3: memref<1x128xf32, #tpu.memory_space<vmem>>, %arg4: memref<8x128xf32, #tpu.memory_space<vmem>>) attributes {dimension_semantics = [#tpu.dimension_semantics<parallel>], iteration_bounds = array<i64: 2>, scalar_prefetch = 0 : i64, scratch_operands = 0 : i64, tpu.core_type = #tpu.core_type<tc>, window_params = [{transform_indices = @transform_0, window_bounds = array<i64: 8, 128>}, {pipeline_mode = #tpu.pipeline_mode<synchronous>, transform_indices = @transform_1, window_bounds = array<i64: 1, 128>}, {pipeline_mode = #tpu.pipeline_mode<synchronous>, transform_indices = @transform_2, window_bounds = array<i64: 1, 128>}, {transform_indices = @transform_3, window_bounds = array<i64: 8, 128>}]} {
    %c0 = arith.constant 0 : index
    %c0_0 = arith.constant 0 : index
    %0 = vector.load %arg1[%c0, %c0_0] : memref<8x128xf32, #tpu.memory_space<vmem>>, vector<8x128xf32>
    %c0_1 = arith.constant 0 : index
    %c0_2 = arith.constant 0 : index
    %1 = vector.load %arg2[%c0_1, %c0_2] : memref<1x128xf32, #tpu.memory_space<vmem>>, vector<1x128xf32>
    %c0_3 = arith.constant 0 : index
    %c0_4 = arith.constant 0 : index
    %2 = vector.load %arg3[%c0_3, %c0_4] : memref<1x128xf32, #tpu.memory_space<vmem>>, vector<1x128xf32>
    %cst = arith.constant dense<0.000000e+00> : vector<8xf32>
    %3 = vector.multi_reduction <add>, %0, %cst [1] : vector<8x128xf32> to vector<8xf32>
    %4 = vector.shape_cast %3 : vector<8xf32> to vector<8x1xf32>
    %cst_5 = arith.constant 3.200000e+01 : f32
    %5 = vector.broadcast %cst_5 : f32 to vector<8x1xf32>
    %6 = arith.divf %4, %5 : vector<8x1xf32>
    %7 = vector.broadcast %6 : vector<8x1xf32> to vector<8x128xf32>
    %8 = arith.subf %0, %7 : vector<8x128xf32>
    %9 = arith.mulf %8, %8 : vector<8x128xf32>
    %10 = tpu.iota {dimensions = array<i32: 1>} : vector<8x128xi32>
    %c32_i32 = arith.constant 32 : i32
    %11 = vector.broadcast %c32_i32 : i32 to vector<8x128xi32>
    %12 = arith.cmpi slt, %10, %11 : vector<8x128xi32>
    %cst_6 = arith.constant 0.000000e+00 : f32
    %13 = vector.broadcast %cst_6 : f32 to vector<8x128xf32>
    %14 = arith.select %12, %9, %13 : vector<8x128xi1>, vector<8x128xf32>
    %cst_7 = arith.constant dense<0.000000e+00> : vector<8xf32>
    %15 = vector.multi_reduction <add>, %14, %cst_7 [1] : vector<8x128xf32> to vector<8xf32>
    %16 = vector.shape_cast %15 : vector<8xf32> to vector<8x1xf32>
    %cst_8 = arith.constant 3.100000e+01 : f32
    %17 = vector.broadcast %cst_8 : f32 to vector<8x1xf32>
    %18 = arith.divf %16, %17 : vector<8x1xf32>
    %19 = math.sqrt %18 : vector<8x1xf32>
    %cst_9 = arith.constant 9.99999997E-7 : f32
    %20 = vector.broadcast %cst_9 : f32 to vector<8x1xf32>
    %21 = arith.addf %19, %20 : vector<8x1xf32>
    %22 = tpu.reciprocal %21 : vector<8x1xf32> -> vector<8x1xf32>
    %23 = vector.broadcast %22 : vector<8x1xf32> to vector<8x128xf32>
    %24 = arith.mulf %8, %23 : vector<8x128xf32>
    %25 = vector.broadcast %1 : vector<1x128xf32> to vector<8x128xf32>
    %26 = arith.mulf %25, %24 : vector<8x128xf32>
    %27 = vector.broadcast %2 : vector<1x128xf32> to vector<8x128xf32>
    %28 = arith.addf %26, %27 : vector<8x128xf32>
    %c0_10 = arith.constant 0 : index
    %c0_11 = arith.constant 0 : index
    %29 = vector.load %arg4[%c0_10, %c0_11] : memref<8x128xf32, #tpu.memory_space<vmem>>, vector<8x128xf32>
    tpu.vector_store %arg4[%c0_10, %c0_11], %28 {strides = array<i32>} : memref<8x128xf32, #tpu.memory_space<vmem>>, vector<8x128xf32>,
    return
  }
  func.func @transform_0(%arg0: i32) -> (i32, i32) {
    %c0_i32 = arith.constant 0 : i32
    %c0_i32_0 = arith.constant 0 : i32
    return %arg0, %c0_i32 : i32, i32
  }
  func.func @transform_1(%arg0: i32) -> (i32, i32) {
    %c0_i32 = arith.constant 0 : i32
    %c0_i32_0 = arith.constant 0 : i32
    %c0_i32_1 = arith.constant 0 : i32
    return %c0_i32, %c0_i32_0 : i32, i32
  }
  func.func @transform_2(%arg0: i32) -> (i32, i32) {
    %c0_i32 = arith.constant 0 : i32
    %c0_i32_0 = arith.constant 0 : i32
    %c0_i32_1 = arith.constant 0 : i32
    return %c0_i32, %c0_i32_0 : i32, i32
  }
  func.func @transform_3(%arg0: i32) -> (i32, i32) {
    %c0_i32 = arith.constant 0 : i32
    %c0_i32_0 = arith.constant 0 : i32
    return %arg0, %c0_i32 : i32, i32
  }
}

</mosaic_0001>

<llo_original>
// kernel: tpu_custom_call.1
$region0: #{tpu_custom_call.1}
  #allocation0 [shape = 'u32[]', space=smem, size = 0x4, offset = 0x4, fixed_abs, tag = 'smem constant byte address 0x4 - core index']
  #allocation1 [shape = 'u32[144,128]{1,0:T(1,128)}', space=vmem, size = 0x12000, scoped, tag = 'internal scratch']
  %s0 = inlined_call_operand.hbm [shape: f32[16,128], index: 0, kind: input, shape index: {}]
  %s1 = inlined_call_operand.vmem [shape: f32[1,128], index: 1, kind: input, shape index: {}]
  %s2 = inlined_call_operand.vmem [shape: f32[1,128], index: 2, kind: input, shape index: {}]
  %s3 = inlined_call_operand.hbm [shape: f32[16,128], index: 3, kind: output, shape index: {}]
  %s4 = sld [smem:[#allocation0]]
  $region49: #{tpu_custom_call.1} parent=0
    _
  %s6 = ssub.s32 1, %s4
  %s7 = scalar_select 0, %s6, %s4
  $region1: #{tpu_custom_call.1} parent=0
    #allocation2 [shape = 'u8[8192]{0}', space=vmem, size = 0x2000, scoped, tag = 'input window, operand 0']
    #allocation3 [shape = 's32[2]{0}', space=sflag, size = 0x8, scoped, tag = 'scoped memory for tpu_custom_call.1']
    #allocation4 [shape = 's32[2]{0}', space=sflag, size = 0x8, scoped, tag = 'scoped memory for tpu_custom_call.1']
    #allocation5 [shape = 'u8[8192]{0}', space=vmem, size = 0x2000, scoped, tag = 'output window, operand 0']
    %8 = vsyncpa [#allocation3], 0
    %s9 = scalar_lea.sflag [#allocation3], 1
    %10 = vsyncpa %s9, 0
    %11 = vsyncpa [#allocation4], 0
    %s12 = scalar_lea.sflag [#allocation4], 1
    %13 = vsyncpa %s12, 0
    loop: start=0, step=1, limit=4
    $region2: #{tpu_custom_call.1} parent=1 // loop_pre_header
      _
    $region3: #{tpu_custom_call.1} parent=1 // loop_header
      %s15 = sphi 0, %s19
      %p16 = scmp.ge.s32.totalorder %s15, 4
      %s25 = sphi 0, %s27
      %s28 = sphi 0, %s25
      %s29 = sphi 0, %s28
      %s45 = sphi 0, %s29
      %s49 = sphi 0, %s49
      %s51 = sphi 0, %s49
      %s52 = sphi 0, %s51
      %s66 = sphi 0, %s52
      %s70 = sphi 0, %s70
      %s72 = sphi 0, %s70
      %s73 = sphi 0, %s72
      %s87 = sphi 0, %s73
      %s93 = sphi 0, %s95
      %s96 = sphi 0, %s93
      %s97 = sphi 0, %s96
      %s113 = sphi 0, %s97
    $region4: #{tpu_custom_call.1} parent=1 // loop_header_branch
      %18 = sbr.rel (%p16) target = $region8
    $region5: #{tpu_custom_call.1} parent=1 // loop_body
      %s20 = ssub.s32 %s15, 1
      %s21 = ssub.s32 %s15, 2
      %s22 = sadd.s32 %s15, 1
      %s23 = ssub.s32 %s15, %s22
      %p24 = scmp.eq.s32.totalorder %s23, 0
      %s26 = sadd.s32 %s25, 1
      %s27 = scalar_select %p24, %s25, %s26
      %p30 = pneg %p24
      %p31 = scmp.eq.s32.totalorder %s15, 1
      %p32 = por %p30, %p31
      %p33 = scmp.ne.s32.totalorder %s25, %s28
      %p34 = scmp.eq.s32.totalorder %s15, 0
      %p35 = por %p33, %p34
      %p36 = scmp.ne.s32.totalorder %s25, %s28
      %p37 = scmp.eq.s32.totalorder %s20, 1
      %p38 = por %p36, %p37
      %p39 = scmp.ne.s32.totalorder %s28, %s29
      %p40 = scmp.eq.s32.totalorder %s20, 0
      %p41 = por %p39, %p40
      %p42 = scmp.ne.s32.totalorder %s28, %s29
      %p43 = scmp.eq.s32.totalorder %s21, 1
      %p44 = por %p42, %p43
      %p46 = scmp.ne.s32.totalorder %s29, %s45
      %p47 = scmp.eq.s32.totalorder %s21, 0
      %p48 = por %p46, %p47
      %s50 = sadd.s32 %s49, 1
      %p53 = scmp.eq.s32.totalorder %s15, 1
      %p54 = scmp.ne.s32.totalorder %s49, %s51
      %p55 = scmp.eq.s32.totalorder %s15, 0
      %p56 = por %p54, %p55
      %p57 = scmp.ne.s32.totalorder %s49, %s51
      %p58 = scmp.eq.s32.totalorder %s20, 1
      %p59 = por %p57, %p58
      %p60 = scmp.ne.s32.totalorder %s51, %s52
      %p61 = scmp.eq.s32.totalorder %s20, 0
      %p62 = por %p60, %p61
      %p63 = scmp.ne.s32.totalorder %s51, %s52
      %p64 = scmp.eq.s32.totalorder %s21, 1
      %p65 = por %p63, %p64
      %p67 = scmp.ne.s32.totalorder %s52, %s66
      %p68 = scmp.eq.s32.totalorder %s21, 0
      %p69 = por %p67, %p68
      %s71 = sadd.s32 %s70, 1
      %p74 = scmp.eq.s32.totalorder %s15, 1
      %p75 = scmp.ne.s32.totalorder %s70, %s72
      %p76 = scmp.eq.s32.totalorder %s15, 0
      %p77 = por %p75, %p76
      %p78 = scmp.ne.s32.totalorder %s70, %s72
      %p79 = scmp.eq.s32.totalorder %s20, 1
      %p80 = por %p78, %p79
      %p81 = scmp.ne.s32.totalorder %s72, %s73
      %p82 = scmp.eq.s32.totalorder %s20, 0
      %p83 = por %p81, %p82
      %p84 = scmp.ne.s32.totalorder %s72, %s73
      %p85 = scmp.eq.s32.totalorder %s21, 1
      %p86 = por %p84, %p85
      %p88 = scmp.ne.s32.totalorder %s73, %s87
      %p89 = scmp.eq.s32.totalorder %s21, 0
      %p90 = por %p88, %p89
      %s91 = ssub.s32 %s15, %s22
      %p92 = scmp.eq.s32.totalorder %s91, 0
      %s94 = sadd.s32 %s93, 1
      %s95 = scalar_select %p92, %s93, %s94
      %p98 = pneg %p92
      %p99 = scmp.eq.s32.totalorder %s15, 1
      %p100 = por %p98, %p99
      %p101 = scmp.ne.s32.totalorder %s93, %s96
      %p102 = scmp.eq.s32.totalorder %s15, 0
      %p103 = por %p101, %p102
      %p104 = scmp.ne.s32.totalorder %s93, %s96
      %p105 = scmp.eq.s32.totalorder %s20, 1
      %p106 = por %p104, %p105
      %p107 = scmp.ne.s32.totalorder %s96, %s97
      %p108 = scmp.eq.s32.totalorder %s20, 0
      %p109 = por %p107, %p108
      %p110 = scmp.ne.s32.totalorder %s96, %s97
      %p111 = scmp.eq.s32.totalorder %s21, 1
      %p112 = por %p110, %p111
      %p114 = scmp.ne.s32.totalorder %s97, %s113
      %p115 = scmp.eq.s32.totalorder %s21, 0
      %p116 = por %p114, %p115
      %p117 = scmp.le.s32.totalorder 1, %s15
      %p118 = scmp.lt.s32.totalorder %s15, 3
      %p119 = pnand %p117, %p118
      %p120 = pneg %p119
      // Predicated region
      $region9: #{tpu_custom_call.1} parent=5 // pred_check
        _
      $region10: #{tpu_custom_call.1} parent=5 // pred_check_branch
        %122 = sbr.rel (%p119) target = $region12
      $region11: #{tpu_custom_call.1} parent=5 // pred_region
        %s123 = ssub.s32 %s15, 1
        // Predicated region
        $region13: #{tpu_custom_call.1} parent=11 // pred_check
          %p124 = pneg %p62
        $region14: #{tpu_custom_call.1} parent=11 // pred_check_branch
          %126 = sbr.rel (%p124) target = $region16
        $region15: #{tpu_custom_call.1} parent=11 // pred_region
          _
        $region16: #{tpu_custom_call.1} parent=11 // pred_fallthru
          _
        // Predicated region
        $region17: #{tpu_custom_call.1} parent=11 // pred_check
          %p127 = pneg %p83
        $region18: #{tpu_custom_call.1} parent=11 // pred_check_branch
          %129 = sbr.rel (%p127) target = $region20
        $region19: #{tpu_custom_call.1} parent=11 // pred_region
          _
        $region20: #{tpu_custom_call.1} parent=11 // pred_fallthru
          _
      $region12: #{tpu_custom_call.1} parent=5 // pred_fallthru
        _
      %p130 = scmp.lt.s32.totalorder %s15, 2
      // Predicated region
      $region21: #{tpu_custom_call.1} parent=5 // pred_check
        %p131 = pneg %p130
      $region22: #{tpu_custom_call.1} parent=5 // pred_check_branch
        %133 = sbr.rel (%p131) target = $region24
      $region23: #{tpu_custom_call.1} parent=5 // pred_region
        // Predicated region
        $region25: #{tpu_custom_call.1} parent=23 // pred_check
          %p134 = pneg %p35
        $region26: #{tpu_custom_call.1} parent=23 // pred_check_branch
          %136 = sbr.rel (%p134) target = $region28
        $region27: #{tpu_custom_call.1} parent=23 // pred_region
          %s137 = sand.u32 %s25, 1
          %s138 = scalar_lea.sflag [#allocation3], %s137
          %s139 = sand.u32 %s25, 1
          %s140 = smul.addr %s139, 8
          %s141 = scalar_lea.vmem [#allocation2], %s140
          %s143 = ssub.s32 128, 128
          %144 = vsyncadd %s138, %s143
          %s145 = smul.addr %s15, 128
          %s146 = scalar_lea.hbm %s0, %s145
          %s148 = sshll.u32 %s141, 4
          %s149 = int_to_ptr.vmem [resolvable:$true] %s148
          %151 = dma.hbm_to_vmem [thread:$0]  %s146, 128, %s149, %s138
        $region28: #{tpu_custom_call.1} parent=23 // pred_fallthru
          _
      $region24: #{tpu_custom_call.1} parent=5 // pred_fallthru
        _
      %p152 = scmp.le.s32.totalorder 1, %s15
      %p153 = scmp.lt.s32.totalorder %s15, 3
      %p154 = pnand %p152, %p153
      %p155 = pneg %p154
      // Predicated region
      $region29: #{tpu_custom_call.1} parent=5 // pred_check
        _
      $region30: #{tpu_custom_call.1} parent=5 // pred_check_branch
        %157 = sbr.rel (%p154) target = $region32
      $region31: #{tpu_custom_call.1} parent=5 // pred_region
        %s158 = ssub.s32 %s15, 1
        %s159 = sand.u32 %s28, 1
        %s160 = scalar_lea.sflag [#allocation3], %s159
        %s161 = sand.u32 %s28, 1
        %s162 = smul.addr %s161, 8
        %s163 = scalar_lea.vmem [#allocation2], %s162
        // Predicated region
        $region33: #{tpu_custom_call.1} parent=31 // pred_check
          %p164 = pneg %p41
        $region34: #{tpu_custom_call.1} parent=31 // pred_check_branch
          %166 = sbr.rel (%p164) target = $region36
        $region35: #{tpu_custom_call.1} parent=31 // pred_region
          %167 = dma.done %s160, 128
        $region36: #{tpu_custom_call.1} parent=31 // pred_fallthru
          _
        %s168 = sand.u32 %s28, 1
        %s169 = scalar_lea.sflag [#allocation3], %s168
        %s170 = sand.u32 %s28, 1
        %s171 = smul.addr %s170, 8
        %s172 = scalar_lea.vmem [#allocation2], %s171
        %p173 = pneg %p41
        %p174 = pneg %p38
        %p175 = pneg %p62
        %p176 = pneg %p59
        %p177 = pneg %p83
        %p178 = pneg %p80
        %p179 = pneg %p109
        %p180 = pneg %p106
        %s181 = sand.u32 %s96, 1
        %s182 = scalar_lea.sflag [#allocation4], %s181
        %s183 = sand.u32 %s96, 1
        %s184 = smul.addr %s183, 8
        %s185 = scalar_lea.vmem [#allocation5], %s184
        %v186 = vld [vmem:[%s163] sm:$0xff]
        %v187 = vld [vmem:[%s1] sm:$0x1]
        %v188 = vld [vmem:[%s2] sm:$0x1]
        %189 = vadd.xlane.f32.xlu0 %v186
        %v190 = vpop.xlane.xlu0 %189
        %v191 = vrcp.pop 32.0
        %v192 = vmul.f32 %v190, %v191
        %v193 = vsub.f32 %v186, %v192
        %v194 = vmul.f32 %v193, %v193
        %v195 = vlaneseq
        %v196 = vand.u32 %v195, 127
        %vm197 = vcmp.lt.s32.totalorder %v196, 32
        %v198 = vsel %vm197, %v194, 0.0
        %199 = vadd.xlane.f32.xlu0 %v198
        %v200 = vpop.xlane.xlu0 %199
        %v201 = vrcp.pop 31.0
        %v202 = vmul.f32 %v200, %v201
        %v203 = vrsqrt.pop %v202
        %v204 = vmul.f32 %v202, %v203
        %vm205 = vcmp.eq.f32.partialorder %v202, inf
        %v206 = vsel %vm205, %v202, %v204
        %vm207 = vcmp.eq.f32.partialorder %v202, 0.0
        %v208 = vand.u32 %v202, 2147483648
        %v209 = vsel %vm207, %v208, %v206
        %v210 = vadd.f32 %v209, 1e-06
        %v211 = vrcp.pop %v210
        %v212 = vmul.f32 %v193, %v211
        %v214 = vlaneseq
        %v215 = vshrl.u32 %v214, 7
        %v216 = vsub.s32 0, %v215
        %v217 = vrot.slane %v187, %v216
        %v219 = vmul.f32 %v217, %v212
        %v221 = vlaneseq
        %v222 = vshrl.u32 %v221, 7
        %v223 = vsub.s32 0, %v222
        %v224 = vrot.slane %v188, %v223
        %v226 = vadd.f32 %v219, %v224
        %227 = vst [vmem:[%s185] sm:$0xff] %v226
        %s228 = sand.u32 %s96, 1
        %s229 = scalar_lea.sflag [#allocation4], %s228
        %s230 = sand.u32 %s96, 1
        %s231 = smul.addr %s230, 8
        %s232 = scalar_lea.vmem [#allocation5], %s231
        // Predicated region
        $region37: #{tpu_custom_call.1} parent=31 // pred_check
          %p233 = pneg %p106
        $region38: #{tpu_custom_call.1} parent=31 // pred_check_branch
          %235 = sbr.rel (%p233) target = $region40
        $region39: #{tpu_custom_call.1} parent=31 // pred_region
          %s237 = ssub.s32 128, 128
          %238 = vsyncadd %s229, %s237
          %s239 = smul.addr %s20, 128
          %s240 = scalar_lea.hbm %s3, %s239
          %s242 = sshll.u32 %s232, 4
          %s243 = int_to_ptr.vmem [resolvable:$true] %s242
          %245 = dma.vmem_to_hbm [thread:$0]  %s243, 128, %s240, %s229
        $region40: #{tpu_custom_call.1} parent=31 // pred_fallthru
          _
      $region32: #{tpu_custom_call.1} parent=5 // pred_fallthru
        _
      %p246 = scmp.le.s32.totalorder 2, %s15
      // Predicated region
      $region41: #{tpu_custom_call.1} parent=5 // pred_check
        %p247 = pneg %p246
      $region42: #{tpu_custom_call.1} parent=5 // pred_check_branch
        %249 = sbr.rel (%p247) target = $region44
      $region43: #{tpu_custom_call.1} parent=5 // pred_region
        %s250 = ssub.s32 %s15, 2
        // Predicated region
        $region45: #{tpu_custom_call.1} parent=43 // pred_check
          %p251 = pneg %p112
        $region46: #{tpu_custom_call.1} parent=43 // pred_check_branch
          %253 = sbr.rel (%p251) target = $region48
        $region47: #{tpu_custom_call.1} parent=43 // pred_region
          %s254 = sand.u32 %s97, 1
          %s255 = scalar_lea.sflag [#allocation4], %s254
          %s256 = sand.u32 %s97, 1
          %s257 = smul.addr %s256, 8
          %s258 = scalar_lea.vmem [#allocation5], %s257
          %259 = dma.done %s255, 128
        $region48: #{tpu_custom_call.1} parent=43 // pred_fallthru
          _
      $region44: #{tpu_custom_call.1} parent=5 // pred_fallthru
        _
    $region6: #{tpu_custom_call.1} parent=1 // loop_footer
      %s19 = sadd.s32 1, %s15
    $region7: #{tpu_custom_call.1} parent=1 // loop_footer_branch
      %14 = sbr.rel target = $region3
    $region8: #{tpu_custom_call.1} parent=1 // loop_exit
      _
    %260 = vsyncpa [#allocation3], 1
    %s261 = scalar_lea.sflag [#allocation3], 1
    %262 = vsyncpa %s261, 1
    %263 = vsyncpa [#allocation4], 1
    %s264 = scalar_lea.sflag [#allocation4], 1
    %265 = vsyncpa %s264, 1

</llo_original>
